<compile_context>
chip_gen: v7x
topology: tpu7x:2x2x1
jax: 0.10.0
libtpu: 0.0.40
codegen_flags: <defaults>
</compile_context>

<pallas_src>
import jax
import jax.numpy as jnp
from jax.experimental import pallas as pl
from jax.experimental.pallas import tpu as pltpu

NUM_CLASSES = 10
MAX_TILE_B = 128  # batch rows per grid step (divisible by 8; tiny VMEM footprint everywhere)


def pack_params(w1, b1, w2, b2):
    """Pack both heads into one lane-dense weight operand + one lane-dense bias row.

    w_packed: [2*NC, D]   rows 0..NC-1 = w1.T, rows NC..2NC-1 = w2.T (D on the lane axis).
    b_packed: [1, 2*NC]   lane-dense bias row, added on the VPU after the matmul.
    """
    wp = jnp.concatenate([w1.T, w2.T], axis=0).astype(jnp.float32)
    bp = jnp.concatenate([b1.reshape(1, -1), b2.reshape(1, -1)], axis=1).astype(jnp.float32)
    return wp, bp


def ensemble_kernel(thr_ref, x_ref, w_ref, b_ref, out_ref):
    thr = thr_ref[0]            # f32 scalar in SMEM (1-D -> 4 bytes)
    x = x_ref[...]              # [TB, D]      f32 batch tile
    w = w_ref[...]              # [2*NC, D]    f32, grid-resident (constant index_map)
    b = b_ref[...]              # [1, 2*NC]    f32, grid-resident

    # Both heads in one MXU matmul; rhs contracted on its lane axis (no in-kernel transpose).
    logits = jax.lax.dot_general(
        x, w, dimension_numbers=(((1,), (1,)), ((), ())),
        preferred_element_type=jnp.float32) + b                   # [TB, 2*NC], lane-dense

    col = jax.lax.broadcasted_iota(jnp.int32, logits.shape, 1)    # [TB, 2*NC]
    is1 = col < NUM_CLASSES
    neg_inf = jnp.float32(-jnp.inf)
    l1 = jnp.where(is1, logits, neg_inf)                          # head-1 logits (rest -> -inf)
    l2 = jnp.where(is1, neg_inf, logits)                          # head-2 logits

    # Confidence gate without an explicit softmax (per row):
    #   max(softmax(l1)) > thr  ⟺  thr * sum(exp(l1 - m1)) < 1
    m1 = jnp.max(l1, axis=-1, keepdims=True)                      # [TB, 1] (reused for argmax)
    sum_exp = jnp.sum(jnp.exp(l1 - m1), axis=-1, keepdims=True)   # [TB, 1]
    use_m1 = sum_exp * thr < 1.0                                  # [TB, 1] bool

    # torch.argmax semantics (first maximal index on ties) via min-of-matching-indices.
    big = jnp.int32(2 * NUM_CLASSES)
    arg1 = jnp.min(jnp.where(l1 == m1, col, big), axis=-1, keepdims=True)
    m2 = jnp.max(l2, axis=-1, keepdims=True)
    arg2 = jnp.min(jnp.where(l2 == m2, col - NUM_CLASSES, big), axis=-1, keepdims=True)

    out_ref[...] = jnp.where(use_m1, arg1, arg2).astype(jnp.int32)


@jax.jit
def ensemble_forward(x, w_packed, b_packed, threshold):
    """x: [B, C, H, W] f32. Returns int32 class index per sample, shape [B].

    B == 1 matches the torch module exactly; larger B applies the same per-sample gate
    independently.  Threshold is traced (no recompile per value).
    """
    B = x.shape[0]
    D = w_packed.shape[1]
    x_flat = x.reshape(B, -1).astype(jnp.float32)   # no bias/zero augmentation here:
    # the kernel adds the bias row itself, so there is no extra wrapper op / HBM round trip.
    assert x_flat.shape[1] == D

    if B <= MAX_TILE_B:
        tb = B                                       # single grid step, block == full array
    else:
        assert B % MAX_TILE_B == 0, "TODO(synk): pad ragged batches to a multiple of 128"
        tb = MAX_TILE_B
    grid = (B // tb,)

    thr = jnp.asarray(threshold, jnp.float32).reshape(1,)

    out = pl.pallas_call(
        ensemble_kernel,
        out_shape=jax.ShapeDtypeStruct((B, 1), jnp.int32),
        grid_spec=pltpu.PrefetchScalarGridSpec(
            num_scalar_prefetch=0,
            grid=grid,
            in_specs=[
                pl.BlockSpec(memory_space=pltpu.MemorySpace.SMEM),   # threshold, f32[1]
                pl.BlockSpec((tb, D), lambda i: (i, 0)),             # x batch tile
                pl.BlockSpec(w_packed.shape, lambda i: (0, 0)),      # packed weights, resident
                pl.BlockSpec(b_packed.shape, lambda i: (0, 0)),      # packed biases, resident
            ],
            out_specs=pl.BlockSpec((tb, 1), lambda i: (i, 0)),
        ),
        compiler_params=pltpu.CompilerParams(
            dimension_semantics=("parallel",)),      # shards batch tiles across v7x's 2 TCs
    )(thr, x_flat, w_packed, b_packed)
    return out[:, 0]


def _reference(x, w1, b1, w2, b2, threshold):
    B = x.shape[0]
    xf = x.reshape(B, -1).astype(jnp.float32)
    l1 = xf @ w1 + b1
    l2 = xf @ w2 + b2
    scores = jax.nn.softmax(l1, axis=1)
    use_m1 = jnp.max(scores, axis=1) > threshold
    return jnp.where(use_m1, jnp.argmax(l1, axis=1), jnp.argmax(l2, axis=1)).astype(jnp.int32)


if __name__ == "__main__":
    key = jax.random.PRNGKey(0)
    kx, kxb, k1, k2, kb1, kb2 = jax.random.split(key, 6)

    C, H, W = 4, 16, 16
    D = C * H * W  # 1024, lane-aligned

    w1 = jax.random.normal(k1, (D, NUM_CLASSES), dtype=jnp.float32) * 0.05
    b1 = jax.random.normal(kb1, (1, NUM_CLASSES), dtype=jnp.float32) * 0.01
    w2 = jax.random.normal(k2, (D, NUM_CLASSES), dtype=jnp.float32) * 0.05
    b2 = jax.random.normal(kb2, (1, NUM_CLASSES), dtype=jnp.float32) * 0.01
    w_packed, b_packed = pack_params(w1, b1, w2, b2)

    # 1) Strict torch semantics: batch of 1 (the module's .item() forces B == 1).
    x1 = jax.random.normal(kx, (1, C, H, W), dtype=jnp.float32)
    for threshold in (0.01, 0.5, 0.99):   # exercises both gating branches, no recompiles
        out = jax.block_until_ready(ensemble_forward(x1, w_packed, b_packed, threshold))
        ref = _reference(x1, w1, b1, w2, b2, threshold)
        assert out.shape == (1,)
        assert int(out[0]) == int(ref[0]), (threshold, out, ref)

    # 2) Batched throughput path: grid over batch tiles, weights VMEM-resident across steps.
    xb = jax.random.normal(kxb, (256, C, H, W), dtype=jnp.float32)
    out_b = jax.block_until_ready(ensemble_forward(xb, w_packed, b_packed, 0.5))
    ref_b = _reference(xb, w1, b1, w2, b2, 0.5)
    assert out_b.shape == (256,)
    assert bool(jnp.all(out_b == ref_b)), (out_b, ref_b)

    print("KERNEL_OK")
</pallas_src>

<mosaic_0001>
module attributes {stable_mosaic.version = 11 : i64} {
  func.func @ensemble_kernel(%arg0: i32, %arg1: memref<1xf32, #tpu.memory_space<smem>>, %arg2: memref<1x1024xf32, #tpu.memory_space<vmem>>, %arg3: memref<20x1024xf32, #tpu.memory_space<vmem>>, %arg4: memref<1x20xf32, #tpu.memory_space<vmem>>, %arg5: memref<1x1xi32, #tpu.memory_space<vmem>>) attributes {dimension_semantics = [#tpu.dimension_semantics<parallel>], iteration_bounds = array<i64: 1>, scalar_prefetch = 0 : i64, scratch_operands = 0 : i64, tpu.core_type = #tpu.core_type<tc>, window_params = [{transform_indices = @transform_0, window_bounds = array<i64: 1>}, {transform_indices = @transform_1, window_bounds = array<i64: 1, 1024>}, {pipeline_mode = #tpu.pipeline_mode<synchronous>, transform_indices = @transform_2, window_bounds = array<i64: 20, 1024>}, {pipeline_mode = #tpu.pipeline_mode<synchronous>, transform_indices = @transform_3, window_bounds = array<i64: 1, 20>}, {transform_indices = @transform_4, window_bounds = array<i64: 1, 1>}]} {
    %c0 = arith.constant 0 : index
    %0 = memref.load %arg1[%c0] : memref<1xf32, #tpu.memory_space<smem>>
    %c0_0 = arith.constant 0 : index
    %c0_1 = arith.constant 0 : index
    %1 = vector.load %arg2[%c0_0, %c0_1] : memref<1x1024xf32, #tpu.memory_space<vmem>>, vector<1x1024xf32>
    %c0_2 = arith.constant 0 : index
    %c0_3 = arith.constant 0 : index
    %2 = vector.load %arg3[%c0_2, %c0_3] : memref<20x1024xf32, #tpu.memory_space<vmem>>, vector<20x1024xf32>
    %c0_4 = arith.constant 0 : index
    %c0_5 = arith.constant 0 : index
    %3 = vector.load %arg4[%c0_4, %c0_5] : memref<1x20xf32, #tpu.memory_space<vmem>>, vector<1x20xf32>
    %cst = arith.constant dense<0.000000e+00> : vector<1x20xf32>
    %4 = tpu.matmul %1, %2, %cst {dimension_numbers = #tpu.dot_dimension_numbers<[1], [1], [0], [0], [0, 0, 1, 0], [], []>} : vector<1x1024xf32>, vector<20x1024xf32>, vector<1x20xf32> -> vector<1x20xf32>
    %5 = arith.addf %4, %3 : vector<1x20xf32>
    %6 = tpu.iota {dimensions = array<i32: 1>} : vector<1x20xi32>
    %c10_i32 = arith.constant 10 : i32
    %7 = vector.broadcast %c10_i32 : i32 to vector<1x20xi32>
    %8 = arith.cmpi slt, %6, %7 : vector<1x20xi32>
    %cst_6 = arith.constant 0xFF800000 : f32
    %9 = vector.broadcast %cst_6 : f32 to vector<1x20xf32>
    %10 = arith.select %8, %5, %9 : vector<1x20xi1>, vector<1x20xf32>
    %cst_7 = arith.constant 0xFF800000 : f32
    %11 = vector.broadcast %cst_7 : f32 to vector<1x20xf32>
    %12 = arith.select %8, %11, %5 : vector<1x20xi1>, vector<1x20xf32>
    %cst_8 = arith.constant dense<0xFF800000> : vector<1xf32>
    %13 = vector.multi_reduction <maximumf>, %10, %cst_8 [1] : vector<1x20xf32> to vector<1xf32>
    %14 = vector.shape_cast %13 : vector<1xf32> to vector<1x1xf32>
    %15 = vector.broadcast %14 : vector<1x1xf32> to vector<1x20xf32>
    %16 = arith.subf %10, %15 : vector<1x20xf32>
    %17 = math.exp %16 : vector<1x20xf32>
    %cst_9 = arith.constant dense<0.000000e+00> : vector<1xf32>
    %18 = vector.multi_reduction <add>, %17, %cst_9 [1] : vector<1x20xf32> to vector<1xf32>
    %19 = vector.shape_cast %18 : vector<1xf32> to vector<1x1xf32>
    %20 = vector.broadcast %0 : f32 to vector<1x1xf32>
    %21 = arith.mulf %19, %20 : vector<1x1xf32>
    %cst_10 = arith.constant 1.000000e+00 : f32
    %22 = vector.broadcast %cst_10 : f32 to vector<1x1xf32>
    %23 = arith.cmpf olt, %21, %22 : vector<1x1xf32>
    %24 = vector.broadcast %14 : vector<1x1xf32> to vector<1x20xf32>
    %25 = arith.cmpf oeq, %10, %24 : vector<1x20xf32>
    %c20_i32 = arith.constant 20 : i32
    %26 = vector.broadcast %c20_i32 : i32 to vector<1x20xi32>
    %27 = arith.select %25, %6, %26 : vector<1x20xi1>, vector<1x20xi32>
    %cst_11 = arith.constant dense<2147483647> : vector<1xi32>
    %28 = vector.multi_reduction <minsi>, %27, %cst_11 [1] : vector<1x20xi32> to vector<1xi32>
    %29 = vector.shape_cast %28 : vector<1xi32> to vector<1x1xi32>
    %cst_12 = arith.constant dense<0xFF800000> : vector<1xf32>
    %30 = vector.multi_reduction <maximumf>, %12, %cst_12 [1] : vector<1x20xf32> to vector<1xf32>
    %31 = vector.shape_cast %30 : vector<1xf32> to vector<1x1xf32>
    %32 = vector.broadcast %31 : vector<1x1xf32> to vector<1x20xf32>
    %33 = arith.cmpf oeq, %12, %32 : vector<1x20xf32>
    %c10_i32_13 = arith.constant 10 : i32
    %34 = vector.broadcast %c10_i32_13 : i32 to vector<1x20xi32>
    %35 = arith.subi %6, %34 : vector<1x20xi32>
    %c20_i32_14 = arith.constant 20 : i32
    %36 = vector.broadcast %c20_i32_14 : i32 to vector<1x20xi32>
    %37 = arith.select %33, %35, %36 : vector<1x20xi1>, vector<1x20xi32>
    %cst_15 = arith.constant dense<2147483647> : vector<1xi32>
    %38 = vector.multi_reduction <minsi>, %37, %cst_15 [1] : vector<1x20xi32> to vector<1xi32>
    %39 = vector.shape_cast %38 : vector<1xi32> to vector<1x1xi32>
    %40 = arith.select %23, %29, %39 : vector<1x1xi1>, vector<1x1xi32>
    %c0_16 = arith.constant 0 : index
    %c0_17 = arith.constant 0 : index
    %41 = vector.load %arg5[%c0_16, %c0_17] : memref<1x1xi32, #tpu.memory_space<vmem>>, vector<1x1xi32>
    tpu.vector_store %arg5[%c0_16, %c0_17], %40 {strides = array<i32>} : memref<1x1xi32, #tpu.memory_space<vmem>>, vector<1x1xi32>,
    return
  }
  func.func @transform_0(%arg0: i32) -> i32 {
    %c0_i32 = arith.constant 0 : i32
    %c0_i32_0 = arith.constant 0 : i32
    return %c0_i32 : i32
  }
  func.func @transform_1(%arg0: i32) -> (i32, i32) {
    %c0_i32 = arith.constant 0 : i32
    %c0_i32_0 = arith.constant 0 : i32
    return %arg0, %c0_i32 : i32, i32
  }
  func.func @transform_2(%arg0: i32) -> (i32, i32) {
    %c0_i32 = arith.constant 0 : i32
    %c0_i32_0 = arith.constant 0 : i32
    %c0_i32_1 = arith.constant 0 : i32
    return %c0_i32, %c0_i32_0 : i32, i32
  }
  func.func @transform_3(%arg0: i32) -> (i32, i32) {
    %c0_i32 = arith.constant 0 : i32
    %c0_i32_0 = arith.constant 0 : i32
    %c0_i32_1 = arith.constant 0 : i32
    return %c0_i32, %c0_i32_0 : i32, i32
  }
  func.func @transform_4(%arg0: i32) -> (i32, i32) {
    %c0_i32 = arith.constant 0 : i32
    %c0_i32_0 = arith.constant 0 : i32
    return %arg0, %c0_i32 : i32, i32
  }
}

</mosaic_0001>

<llo_original>
// kernel: ensemble_forward.1
$region0: #{ensemble_forward.1}
  #allocation0 [shape = 'u32[]', space=smem, size = 0x4, offset = 0x4, fixed_abs, tag = 'smem constant byte address 0x4 - core index']
  #allocation1 [shape = 'u32[144,128]{1,0:T(1,128)}', space=vmem, size = 0x12000, scoped, tag = 'internal scratch']
  #allocation2 [shape = 'f32[1]{0:T(128)S(6)}', space=smem, size = 0x200, scoped, tag = 'scoped memory for ensemble_forward.1']
  %s0 = inlined_call_operand.<no memory space> [shape: f32[1], index: 0, kind: input, shape index: {}]
  %s1 = inlined_call_operand.vmem [shape: f32[1,1024], index: 1, kind: input, shape index: {}]
  %s2 = inlined_call_operand.hbm [shape: f32[20,1024], index: 2, kind: input, shape index: {}]
  %s3 = inlined_call_operand.vmem [shape: f32[1,20], index: 3, kind: input, shape index: {}]
  %s4 = inlined_call_operand.hbm [shape: s32[1,1], index: 4, kind: output, shape index: {}]
  %s5 = sld [smem:[#allocation0]]
  $region30: #{ensemble_forward.1} parent=0
    _
  %s7 = ssub.s32 1, %s5
  %s8 = scalar_select 0, %s7, %s5
  %9 = sst [smem:[#allocation2]] %s0
  $region1: #{ensemble_forward.1} parent=0
    #allocation3 [shape = 'u8[98304]{0}', space=vmem, size = 0x18000, scoped, tag = 'input window, operand 2, single buffered']
    #allocation4 [shape = 's32[1]{0}', space=sflag, size = 0x4, scoped, tag = 'scoped memory for ensemble_forward.1']
    #allocation5 [shape = 's32[1]{0}', space=sflag, size = 0x4, scoped, tag = 'scoped memory for ensemble_forward.1']
    #allocation6 [shape = 'u8[512]{0}', space=vmem, size = 0x400, scoped, tag = 'output window, operand 0, single buffered']
    %10 = vsyncpa [#allocation4], 0
    %11 = vsyncpa [#allocation5], 0
    // Predicated region
    $region2: #{ensemble_forward.1} parent=1 // pred_check
      _
    $region3: #{ensemble_forward.1} parent=1 // pred_check_branch
      %13 = sbr.rel (0) target = $region5
    $region4: #{ensemble_forward.1} parent=1 // pred_region
      _
    $region5: #{ensemble_forward.1} parent=1 // pred_fallthru
      _
    // Predicated region
    $region6: #{ensemble_forward.1} parent=1 // pred_check
      _
    $region7: #{ensemble_forward.1} parent=1 // pred_check_branch
      %15 = sbr.rel (0) target = $region9
    $region8: #{ensemble_forward.1} parent=1 // pred_region
      _
    $region9: #{ensemble_forward.1} parent=1 // pred_fallthru
      _
    // Predicated region
    $region10: #{ensemble_forward.1} parent=1 // pred_check
      _
    $region11: #{ensemble_forward.1} parent=1 // pred_check_branch
      %17 = sbr.rel (0) target = $region13
    $region12: #{ensemble_forward.1} parent=1 // pred_region
      %s19 = ssub.s32 3072, 3072
      %20 = vsyncadd [#allocation4], %s19
      %s21 = sshll.u32 [#allocation3], 4
      %s22 = int_to_ptr.vmem [resolvable:$true] %s21
      %27 = dma.hbm_to_vmem [thread:$0]  %s2, 3072, %s22, [#allocation4], 1024, 1024, 64
    $region13: #{ensemble_forward.1} parent=1 // pred_fallthru
      _
    // Predicated region
    $region14: #{ensemble_forward.1} parent=1 // pred_check
      _
    $region15: #{ensemble_forward.1} parent=1 // pred_check_branch
      %29 = sbr.rel (0) target = $region17
    $region16: #{ensemble_forward.1} parent=1 // pred_region
      _
    $region17: #{ensemble_forward.1} parent=1 // pred_fallthru
      _
    // Predicated region
    $region18: #{ensemble_forward.1} parent=1 // pred_check
      _
    $region19: #{ensemble_forward.1} parent=1 // pred_check_branch
      %31 = sbr.rel (0) target = $region21
    $region20: #{ensemble_forward.1} parent=1 // pred_region
      %32 = dma.done [#allocation4], 3072
    $region21: #{ensemble_forward.1} parent=1 // pred_fallthru
      _
    %s33 = sld [smem:[#allocation2]]
    %v34 = vld [vmem:[%s1] sm:$0xff]
    %v35 = vld [vmem:[#allocation3] sm:$0xff]
    %v36 = vld [vmem:[#allocation3 + $0x8] sm:$0xff]
    %v37 = vld [vmem:[#allocation3 + $0x10] sm:$0xff]
    %v38 = vld [vmem:[#allocation3 + $0x18] sm:$0xff]
    %v39 = vld [vmem:[#allocation3 + $0x20] sm:$0xff]
    %v40 = vld [vmem:[#allocation3 + $0x28] sm:$0xff]
    %v41 = vld [vmem:[#allocation3 + $0x30] sm:$0xff]
    %v42 = vld [vmem:[#allocation3 + $0x38] sm:$0xff]
    %v43 = vld [vmem:[#allocation3 + $0x40] sm:$0xff]
    %v44 = vld [vmem:[#allocation3 + $0x48] sm:$0xff]
    %v45 = vld [vmem:[#allocation3 + $0x50] sm:$0xff]
    %v46 = vld [vmem:[#allocation3 + $0x58] sm:$0xff]
    %v47 = vld [vmem:[#allocation3 + $0x60] sm:$0xff]
    %v48 = vld [vmem:[#allocation3 + $0x68] sm:$0xff]
    %v49 = vld [vmem:[#allocation3 + $0x70] sm:$0xff]
    %v50 = vld [vmem:[#allocation3 + $0x78] sm:$0xff]
    %v51 = vld [vmem:[#allocation3 + $0x80] sm:$0xf]
    %v52 = vld [vmem:[#allocation3 + $0x88] sm:$0xf]
    %v53 = vld [vmem:[#allocation3 + $0x90] sm:$0xf]
    %v54 = vld [vmem:[#allocation3 + $0x98] sm:$0xf]
    %v55 = vld [vmem:[#allocation3 + $0xa0] sm:$0xf]
    %v56 = vld [vmem:[#allocation3 + $0xa8] sm:$0xf]
    %v57 = vld [vmem:[#allocation3 + $0xb0] sm:$0xf]
    %v58 = vld [vmem:[#allocation3 + $0xb8] sm:$0xf]
    %v59 = vld [vmem:[%s3] sm:$0x1]
    %v61 = vlaneseq
    %v62 = vshrl.u32 %v61, 7
    %v63 = vsub.s32 0, %v62
    %v64 = vrot.slane %v34, %v63
    %v65 = vlaneseq
    %v66 = vshrl.u32 %v65, 7
    %v67 = vsub.s32 1, %v66
    %v68 = vrot.slane %v34, %v67
    %v69 = vlaneseq
    %v70 = vshrl.u32 %v69, 7
    %v71 = vsub.s32 2, %v70
    %v72 = vrot.slane %v34, %v71
    %v73 = vlaneseq
    %v74 = vshrl.u32 %v73, 7
    %v75 = vsub.s32 3, %v74
    %v76 = vrot.slane %v34, %v75
    %v77 = vlaneseq
    %v78 = vshrl.u32 %v77, 7
    %v79 = vsub.s32 4, %v78
    %v80 = vrot.slane %v34, %v79
    %v81 = vlaneseq
    %v82 = vshrl.u32 %v81, 7
    %v83 = vsub.s32 5, %v82
    %v84 = vrot.slane %v34, %v83
    %v85 = vlaneseq
    %v86 = vshrl.u32 %v85, 7
    %v87 = vsub.s32 6, %v86
    %v88 = vrot.slane %v34, %v87
    %v89 = vlaneseq
    %v90 = vshrl.u32 %v89, 7
    %v91 = vsub.s32 7, %v90
    %v92 = vrot.slane %v34, %v91
    %101 = vmatprep.subr.mxu0 %v36
    %102 = vmatpush1.xpose.msra.mxu0 %v35
    %103 = vmatprep.subr.mxu0 %v44
    %104 = vmatpush1.xpose.msra.mxu0 %v43
    %105 = vmatprep.subr.mxu0 %v52
    %106 = vmatpush1.xpose.msra.mxu0 %v51
    %107 = vmatprep.subr.mxu0 0.0
    %108 = vmatpush1.xpose.msra.mxu0 0.0
    %109 = vmatprep.subr.mxu0 0.0
    %110 = vmatpush1.xpose.msra.mxu0 0.0
    %111 = vmatprep.subr.mxu0 0.0
    %112 = vmatpush1.xpose.msra.mxu0 0.0
    %113 = vmatprep.subr.mxu0 0.0
    %114 = vmatpush1.xpose.msra.mxu0 0.0
    %115 = vmatprep.subr.mxu0 0.0
    %116 = vmatpush1.xpose.msra.mxu0 0.0
    %117 = vmatprep.subr.mxu0 0.0
    %118 = vmatpush1.xpose.msra.mxu0 0.0
    %119 = vmatprep.subr.mxu0 0.0
    %120 = vmatpush1.xpose.msra.mxu0 0.0
    %121 = vmatprep.subr.mxu0 0.0
    %122 = vmatpush1.xpose.msra.mxu0 0.0
    %123 = vmatprep.subr.mxu0 0.0
    %124 = vmatpush1.xpose.msra.mxu0 0.0
    %125 = vmatprep.subr.mxu0 0.0
    %126 = vmatpush1.xpose.msra.mxu0 0.0
    %127 = vmatprep.subr.mxu0 0.0
    %128 = vmatpush1.xpose.msra.mxu0 0.0
    %129 = vmatprep.subr.mxu0 0.0
    %130 = vmatpush1.xpose.msra.mxu0 0.0
    %131 = vmatprep.subr.mxu0 0.0
    %132 = vmatpush1.xpose.msra.mxu0 0.0
    %133 = vmatprep.subr.mxu0 0.0
    %134 = vmatpush1.xpose.msra.mxu0 0.0
    %135 = vmatprep.subr.mxu0 0.0
    %136 = vmatpush1.xpose.msra.mxu0 0.0
    %137 = vmatprep.subr.mxu0 0.0
    %138 = vmatpush1.xpose.msra.mxu0 0.0
    %139 = vmatprep.subr.mxu0 0.0
    %140 = vmatpush1.xpose.msra.mxu0 0.0
    %141 = vmatprep.subr.mxu0 0.0
    %142 = vmatpush1.xpose.msra.mxu0 0.0
    %143 = vmatprep.subr.mxu0 0.0
    %144 = vmatpush1.xpose.msra.mxu0 0.0
    %145 = vmatprep.subr.mxu0 0.0
    %146 = vmatpush1.xpose.msra.mxu0 0.0
    %147 = vmatprep.subr.mxu0 0.0
    %148 = vmatpush1.xpose.msra.mxu0 0.0
    %149 = vmatprep.subr.mxu0 0.0
    %150 = vmatpush1.xpose.msra.mxu0 0.0
    %151 = vmatprep.subr.mxu0 0.0
    %152 = vmatpush1.xpose.msra.mxu0 0.0
    %153 = vmatprep.subr.mxu0 0.0
    %154 = vmatpush1.xpose.msra.mxu0 0.0
    %155 = vmatprep.subr.mxu0 0.0
    %156 = vmatpush1.xpose.msra.mxu0 0.0
    %157 = vmatprep.subr.mxu0 0.0
    %158 = vmatpush1.xpose.msra.mxu0 0.0
    %159 = vmatprep.subr.mxu0 0.0
    %160 = vmatpush1.xpose.msra.mxu0 0.0
    %161 = vmatprep.subr.mxu0 0.0
    %162 = vmatpush1.xpose.msra.mxu0 0.0
    %163 = vmatprep.subr.mxu0 0.0
    %164 = vmatpush1.xpose.msra.mxu0 0.0
    %165 = vmatprep.mubr.f32.mxu0 %v68
    %166 = vmatmul.mubr.f32.gmra.mrb[0].mxu0 %v64
    %v167 = vpop.f32.mrb[0].mxu0
    %v168 = vadd.f32 %v59, %v167
    %v169 = vpop.f32.mrb[0].mxu0
    %170 = vdwg.mxu0
    %171 = vmatprep.subr.mxu0 %v38
    %172 = vmatpush1.xpose.msra.mxu0 %v37
    %173 = vmatprep.subr.mxu0 %v46
    %174 = vmatpush1.xpose.msra.mxu0 %v45
    %175 = vmatprep.subr.mxu0 %v54
    %176 = vmatpush1.xpose.msra.mxu0 %v53
    %177 = vmatprep.subr.mxu0 0.0
    %178 = vmatpush1.xpose.msra.mxu0 0.0
    %179 = vmatprep.subr.mxu0 0.0
    %180 = vmatpush1.xpose.msra.mxu0 0.0
    %181 = vmatprep.subr.mxu0 0.0
    %182 = vmatpush1.xpose.msra.mxu0 0.0
    %183 = vmatprep.subr.mxu0 0.0
    %184 = vmatpush1.xpose.msra.mxu0 0.0
    %185 = vmatprep.subr.mxu0 0.0
    %186 = vmatpush1.xpose.msra.mxu0 0.0
    %187 = vmatprep.subr.mxu0 0.0
    %188 = vmatpush1.xpose.msra.mxu0 0.0
    %189 = vmatprep.subr.mxu0 0.0
    %190 = vmatpush1.xpose.msra.mxu0 0.0
    %191 = vmatprep.subr.mxu0 0.0
    %192 = vmatpush1.xpose.msra.mxu0 0.0
    %193 = vmatprep.subr.mxu0 0.0
    %194 = vmatpush1.xpose.msra.mxu0 0.0
    %195 = vmatprep.subr.mxu0 0.0
    %196 = vmatpush1.xpose.msra.mxu0 0.0
    %197 = vmatprep.subr.mxu0 0.0
    %198 = vmatpush1.xpose.msra.mxu0 0.0
    %199 = vmatprep.subr.mxu0 0.0
    %200 = vmatpush1.xpose.msra.mxu0 0.0
    %201 = vmatprep.subr.mxu0 0.0
    %202 = vmatpush1.xpose.msra.mxu0 0.0
    %203 = vmatprep.subr.mxu0 0.0
    %204 = vmatpush1.xpose.msra.mxu0 0.0
    %205 = vmatprep.subr.mxu0 0.0
    %206 = vmatpush1.xpose.msra.mxu0 0.0
    %207 = vmatprep.subr.mxu0 0.0
    %208 = vmatpush1.xpose.msra.mxu0 0.0
    %209 = vmatprep.subr.mxu0 0.0
    %210 = vmatpush1.xpose.msra.mxu0 0.0
    %211 = vmatprep.subr.mxu0 0.0
    %212 = vmatpush1.xpose.msra.mxu0 0.0
    %213 = vmatprep.subr.mxu0 0.0
    %214 = vmatpush1.xpose.msra.mxu0 0.0
    %215 = vmatprep.subr.mxu0 0.0
    %216 = vmatpush1.xpose.msra.mxu0 0.0
    %217 = vmatprep.subr.mxu0 0.0
    %218 = vmatpush1.xpose.msra.mxu0 0.0
    %219 = vmatprep.subr.mxu0 0.0
    %220 = vmatpush1.xpose.msra.mxu0 0.0
    %221 = vmatprep.subr.mxu0 0.0
    %222 = vmatpush1.xpose.msra.mxu0 0.0
    %223 = vmatprep.subr.mxu0 0.0
    %224 = vmatpush1.xpose.msra.mxu0 0.0
    %225 = vmatprep.subr.mxu0 0.0
    %226 = vmatpush1.xpose.msra.mxu0 0.0
    %227 = vmatprep.subr.mxu0 0.0
    %228 = vmatpush1.xpose.msra.mxu0 0.0
    %229 = vmatprep.subr.mxu0 0.0
    %230 = vmatpush1.xpose.msra.mxu0 0.0
    %231 = vmatprep.subr.mxu0 0.0
    %232 = vmatpush1.xpose.msra.mxu0 0.0
    %233 = vmatprep.subr.mxu0 0.0
    %234 = vmatpush1.xpose.msra.mxu0 0.0
    %235 = vmatprep.mubr.f32.mxu0 %v76
    %236 = vmatmul.mubr.f32.gmra.mrb[0].mxu0 %v72
    %v237 = vpop.f32.mrb[0].mxu0
    %v238 = vadd.f32 %v168, %v237
    %v239 = vpop.f32.mrb[0].mxu0
    %240 = vdwg.mxu0
    %241 = vmatprep.subr.mxu0 %v40
    %242 = vmatpush1.xpose.msra.mxu0 %v39
    %243 = vmatprep.subr.mxu0 %v48
    %244 = vmatpush1.xpose.msra.mxu0 %v47
    %245 = vmatprep.subr.mxu0 %v56
    %246 = vmatpush1.xpose.msra.mxu0 %v55
    %247 = vmatprep.subr.mxu0 0.0
    %248 = vmatpush1.xpose.msra.mxu0 0.0
    %249 = vmatprep.subr.mxu0 0.0
    %250 = vmatpush1.xpose.msra.mxu0 0.0
    %251 = vmatprep.subr.mxu0 0.0
    %252 = vmatpush1.xpose.msra.mxu0 0.0
    %253 = vmatprep.subr.mxu0 0.0
    %254 = vmatpush1.xpose.msra.mxu0 0.0
    %255 = vmatprep.subr.mxu0 0.0
    %256 = vmatpush1.xpose.msra.mxu0 0.0
    %257 = vmatprep.subr.mxu0 0.0
    %258 = vmatpush1.xpose.msra.mxu0 0.0
    %259 = vmatprep.subr.mxu0 0.0
    %260 = vmatpush1.xpose.msra.mxu0 0.0
    %261 = vmatprep.subr.mxu0 0.0
    %262 = vmatpush1.xpose.msra.mxu0 0.0
    %263 = vmatprep.subr.mxu0 0.0
    %264 = vmatpush1.xpose.msra.mxu0 0.0
    %265 = vmatprep.subr.mxu0 0.0
    %266 = vmatpush1.xpose.msra.mxu0 0.0
    %267 = vmatprep.subr.mxu0 0.0
    %268 = vmatpush1.xpose.msra.mxu0 0.0
    %269 = vmatprep.subr.mxu0 0.0
    %270 = vmatpush1.xpose.msra.mxu0 0.0
    %271 = vmatprep.subr.mxu0 0.0
    %272 = vmatpush1.xpose.msra.mxu0 0.0
    %273 = vmatprep.subr.mxu0 0.0
    %274 = vmatpush1.xpose.msra.mxu0 0.0
    %275 = vmatprep.subr.mxu0 0.0
    %276 = vmatpush1.xpose.msra.mxu0 0.0
    %277 = vmatprep.subr.mxu0 0.0
    %278 = vmatpush1.xpose.msra.mxu0 0.0
    %279 = vmatprep.subr.mxu0 0.0
    %280 = vmatpush1.xpose.msra.mxu0 0.0
    %281 = vmatprep.subr.mxu0 0.0
    %282 = vmatpush1.xpose.msra.mxu0 0.0
    %283 = vmatprep.subr.mxu0 0.0
    %284 = vmatpush1.xpose.msra.mxu0 0.0
    %285 = vmatprep.subr.mxu0 0.0
    %286 = vmatpush1.xpose.msra.mxu0 0.0
    %287 = vmatprep.subr.mxu0 0.0
    %288 = vmatpush1.xpose.msra.mxu0 0.0
    %289 = vmatprep.subr.mxu0 0.0
    %290 = vmatpush1.xpose.msra.mxu0 0.0
    %291 = vmatprep.subr.mxu0 0.0
    %292 = vmatpush1.xpose.msra.mxu0 0.0
    %293 = vmatprep.subr.mxu0 0.0
    %294 = vmatpush1.xpose.msra.mxu0 0.0
    %295 = vmatprep.subr.mxu0 0.0
    %296 = vmatpush1.xpose.msra.mxu0 0.0
    %297 = vmatprep.subr.mxu0 0.0
    %298 = vmatpush1.xpose.msra.mxu0 0.0
    %299 = vmatprep.subr.mxu0 0.0
    %300 = vmatpush1.xpose.msra.mxu0 0.0
    %301 = vmatprep.subr.mxu0 0.0
    %302 = vmatpush1.xpose.msra.mxu0 0.0
    %303 = vmatprep.subr.mxu0 0.0
    %304 = vmatpush1.xpose.msra.mxu0 0.0
    %305 = vmatprep.mubr.f32.mxu0 %v84
    %306 = vmatmul.mubr.f32.gmra.mrb[0].mxu0 %v80
    %v307 = vpop.f32.mrb[0].mxu0
    %v308 = vadd.f32 %v238, %v307
    %v309 = vpop.f32.mrb[0].mxu0
    %310 = vdwg.mxu0
    %311 = vmatprep.subr.mxu0 %v42
    %312 = vmatpush1.xpose.msra.mxu0 %v41
    %313 = vmatprep.subr.mxu0 %v50
    %314 = vmatpush1.xpose.msra.mxu0 %v49
    %315 = vmatprep.subr.mxu0 %v58
    %316 = vmatpush1.xpose.msra.mxu0 %v57
    %317 = vmatprep.subr.mxu0 0.0
    %318 = vmatpush1.xpose.msra.mxu0 0.0
    %319 = vmatprep.subr.mxu0 0.0
    %320 = vmatpush1.xpose.msra.mxu0 0.0
    %321 = vmatprep.subr.mxu0 0.0
    %322 = vmatpush1.xpose.msra.mxu0 0.0
    %323 = vmatprep.subr.mxu0 0.0
    %324 = vmatpush1.xpose.msra.mxu0 0.0
    %325 = vmatprep.subr.mxu0 0.0
    %326 = vmatpush1.xpose.msra.mxu0 0.0
    %327 = vmatprep.subr.mxu0 0.0
    %328 = vmatpush1.xpose.msra.mxu0 0.0
    %329 = vmatprep.subr.mxu0 0.0
    %330 = vmatpush1.xpose.msra.mxu0 0.0
    %331 = vmatprep.subr.mxu0 0.0
    %332 = vmatpush1.xpose.msra.mxu0 0.0
    %333 = vmatprep.subr.mxu0 0.0
    %334 = vmatpush1.xpose.msra.mxu0 0.0
    %335 = vmatprep.subr.mxu0 0.0
    %336 = vmatpush1.xpose.msra.mxu0 0.0
    %337 = vmatprep.subr.mxu0 0.0
    %338 = vmatpush1.xpose.msra.mxu0 0.0
    %339 = vmatprep.subr.mxu0 0.0
    %340 = vmatpush1.xpose.msra.mxu0 0.0
    %341 = vmatprep.subr.mxu0 0.0
    %342 = vmatpush1.xpose.msra.mxu0 0.0
    %343 = vmatprep.subr.mxu0 0.0
    %344 = vmatpush1.xpose.msra.mxu0 0.0
    %345 = vmatprep.subr.mxu0 0.0
    %346 = vmatpush1.xpose.msra.mxu0 0.0
    %347 = vmatprep.subr.mxu0 0.0
    %348 = vmatpush1.xpose.msra.mxu0 0.0
    %349 = vmatprep.subr.mxu0 0.0
    %350 = vmatpush1.xpose.msra.mxu0 0.0
    %351 = vmatprep.subr.mxu0 0.0
    %352 = vmatpush1.xpose.msra.mxu0 0.0
    %353 = vmatprep.subr.mxu0 0.0
    %354 = vmatpush1.xpose.msra.mxu0 0.0
    %355 = vmatprep.subr.mxu0 0.0
    %356 = vmatpush1.xpose.msra.mxu0 0.0
    %357 = vmatprep.subr.mxu0 0.0
    %358 = vmatpush1.xpose.msra.mxu0 0.0
    %359 = vmatprep.subr.mxu0 0.0
    %360 = vmatpush1.xpose.msra.mxu0 0.0
    %361 = vmatprep.subr.mxu0 0.0
    %362 = vmatpush1.xpose.msra.mxu0 0.0
    %363 = vmatprep.subr.mxu0 0.0
    %364 = vmatpush1.xpose.msra.mxu0 0.0
    %365 = vmatprep.subr.mxu0 0.0
    %366 = vmatpush1.xpose.msra.mxu0 0.0
    %367 = vmatprep.subr.mxu0 0.0
    %368 = vmatpush1.xpose.msra.mxu0 0.0
    %369 = vmatprep.subr.mxu0 0.0
    %370 = vmatpush1.xpose.msra.mxu0 0.0
    %371 = vmatprep.subr.mxu0 0.0
    %372 = vmatpush1.xpose.msra.mxu0 0.0
    %373 = vmatprep.subr.mxu0 0.0
    %374 = vmatpush1.xpose.msra.mxu0 0.0
    %375 = vmatprep.mubr.f32.mxu0 %v92
    %376 = vmatmul.mubr.f32.gmra.mrb[0].mxu0 %v88
    %v377 = vpop.f32.mrb[0].mxu0
    %v378 = vadd.f32 %v308, %v377
    %v379 = vpop.f32.mrb[0].mxu0
    %380 = vdwg.mxu0
    %v381 = vlaneseq
    %v382 = vand.u32 %v381, 127
    %vm383 = vcmp.lt.s32.totalorder %v382, 10
    %v384 = vsel %vm383, %v378, -inf
    %v385 = vsel %vm383, -inf, %v378
    %vm386 = vcmask 155648
    %v387 = vsel %vm386, %v384, -inf
    %388 = vmax.xlane.f32.xlu0 %v387
    %v389 = vpop.xlane.xlu0 %388
    %v390 = vsub.f32 %v384, %v389
    %v391 = vmul.f32 %v390, 1.442695
    %v392 = vpow.pop %v391
    %v393 = vsel %vm386, %v392, 0.0
    %394 = vadd.xlane.f32.xlu0 %v393
    %v395 = vpop.xlane.xlu0 %394
    %v396 = vstv %s33
    %v397 = vmul.f32 %v395, %v396
    %vm398 = vcmp.lt.f32.partialorder %v397, 1.0
    %vm399 = vcmp.eq.f32.partialorder %v384, %v389
    %v400 = vsel %vm399, %v382, 20
    %v401 = vsel %vm386, %v400, 2147483647
    %v402 = vand.u32 %v401, 65535
    %v403 = vshra.s32 %v401, 16
    %v404 = vcvt.s32.f32 %v402
    %v405 = vcvt.s32.f32 %v403
    %406 = vmin.xlane.f32.xlu0 %v405
    %v407 = vpop.xlane.xlu0 %406
    %vm408 = vcmp.eq.f32.partialorder %v405, %v407
    %v409 = vsel %vm408, %v404, inf
    %410 = vmin.xlane.f32.xlu0 %v409
    %v411 = vpop.xlane.xlu0 %410
    %v412 = vcvt.f32.s32 %v411
    %v413 = vcvt.f32.s32 %v407
    %v414 = vshll.u32 %v413, 16
    %v415 = vadd.s32 %v414, %v412
    %v416 = vsel %vm386, %v385, -inf
    %417 = vmax.xlane.f32.xlu0 %v416
    %v418 = vpop.xlane.xlu0 %417
    %vm419 = vcmp.eq.f32.partialorder %v385, %v418
    %v420 = vsub.s32 %v382, 10
    %v421 = vsel %vm419, %v420, 20
    %v422 = vsel %vm386, %v421, 2147483647
    %v423 = vand.u32 %v422, 65535
    %v424 = vshra.s32 %v422, 16
    %v425 = vcvt.s32.f32 %v423
    %v426 = vcvt.s32.f32 %v424
    %427 = vmin.xlane.f32.xlu0 %v426
    %v428 = vpop.xlane.xlu0 %427
    %vm429 = vcmp.eq.f32.partialorder %v426, %v428
    %v430 = vsel %vm429, %v425, inf
    %431 = vmin.xlane.f32.xlu0 %v430
    %v432 = vpop.xlane.xlu0 %431
    %v433 = vcvt.f32.s32 %v432
    %v434 = vcvt.f32.s32 %v428
    %v435 = vshll.u32 %v434, 16
    %v436 = vadd.s32 %v435, %v433
    %v437 = vsel %vm398, %v415, %v436
    %vm438 = vcmask 0
    %439 = vst.msk [vmem:[#allocation6] sm:$0x1] %vm438, %v437
    // Predicated region
    $region22: #{ensemble_forward.1} parent=1 // pred_check
      _
    $region23: #{ensemble_forward.1} parent=1 // pred_check_branch
      %441 = sbr.rel (0) target = $region25
    $region24: #{ensemble_forward.1} parent=1 // pred_region
      %s443 = ssub.s32 16, 16
      %444 = vsyncadd [#allocation5], %s443
      %s446 = sshll.u32 [#allocation6], 4
      %s447 = int_to_ptr.vmem [resolvable:$true] %s446
      %449 = dma.vmem_to_hbm [thread:$0]  %s447, 16, %s4, [#allocation5]
    $region25: #{ensemble_forward.1} parent=1 // pred_fallthru
      _
    // Predicated region
    $region26: #{ensemble_forward.1} parent=1 // pred_check
      _
    $region27: #{ensemble_forward.1} parent=1 // pred_check_branch
      %451 = sbr.rel (0) target = $region29
    $region28: #{ensemble_forward.1} parent=1 // pred_region
      %452 = dma.done [#allocation5], 16
    $region29: #{ensemble_forward.1} parent=1 // pred_fallthru
      _
    %453 = vsyncpa [#allocation4], 1
    %454 = vsyncpa [#allocation5], 1

</llo_original>
